<compile_context>
chip_gen: v7x
topology: tpu7x:2x2x1
jax: 0.10.0
libtpu: 0.0.40
codegen_flags: <defaults>
</compile_context>

<pallas_src>
import jax
import jax.numpy as jnp
from jax.experimental import pallas as pl
from jax.experimental.pallas import tpu as pltpu

IN_DIM = 784
H1, H2, H3, OUT_DIM = 128, 64, 32, 10


def _round_up(x, m):
    return ((x + m - 1) // m) * m


def mlp_kernel(x_ref, w1_ref, b1_ref, w2_ref, b2_ref,
               w3_ref, b3_ref, w4_ref, b4_ref, o_ref):
    # x_ref: (TB, 784) bf16; weights bf16 (in, out); biases f32 (1, out).
    h = jnp.dot(x_ref[...], w1_ref[...],
                preferred_element_type=jnp.float32) + b1_ref[...]
    h = jnp.maximum(h, 0.0)                                            # (TB, 128)
    h = jnp.dot(h.astype(jnp.bfloat16), w2_ref[...],
                preferred_element_type=jnp.float32) + b2_ref[...]
    h = jnp.maximum(h, 0.0)                                            # (TB, 64)
    h = jnp.dot(h.astype(jnp.bfloat16), w3_ref[...],
                preferred_element_type=jnp.float32) + b3_ref[...]
    h = jnp.maximum(h, 0.0)                                            # (TB, 32)
    h = jnp.dot(h.astype(jnp.bfloat16), w4_ref[...],
                preferred_element_type=jnp.float32) + b4_ref[...]
    o_ref[...] = h.astype(o_ref.dtype)                                 # (TB, 10)


def prepare_params(params):
    """One-time parameter prep (hoisted out of the per-call forward path):
    bf16 weights (in, out), f32 biases reshaped to (1, out)."""
    prepped = []
    for w, b in params:
        prepped.append((jnp.asarray(w, jnp.bfloat16),
                        jnp.asarray(b, jnp.float32).reshape(1, -1)))
    return tuple(prepped)


def _choose_tile(b):
    b16 = _round_up(b, 16)
    if b16 <= 16:
        return b16  # tiny (inference) batch: one small step, nothing to split
    # Aim for >=2 grid steps (v7x two-TensorCore sharding + pipeline overlap of
    # step i+1) while keeping the tile large enough to amortize the ~0.35us
    # per-step overhead. Cap at 1024 rows: x double-buffer ~3.2 MB + weights
    # <0.3 MB fits comfortably within v5e's 16 MiB default scoped VMEM.
    half = _round_up((b16 + 1) // 2, 16)
    return min(1024, half)


def neural_net_forward(x_nchw, prepped_params):
    """Forward pass of NeuralNet. x_nchw: (B, C, H, W) with C*H*W == 784."""
    b = x_nchw.shape[0]
    (w1, b1), (w2, b2), (w3, b3), (w4, b4) = prepped_params

    # Single pass over x: flatten (x.view(-1, 784)) + cast to the MXU input
    # dtype. Only the batch dimension is padded (rows of zeros), if at all.
    x = x_nchw.reshape(b, IN_DIM).astype(jnp.bfloat16)

    tb = _choose_tile(b)
    b_pad = _round_up(b, tb)
    if b_pad != b:
        x = jnp.pad(x, ((0, b_pad - b), (0, 0)))

    grid = (b_pad // tb,)

    def const_spec(shape):
        # Full-block, VMEM-resident weight/bias across all grid steps.
        return pl.BlockSpec(shape, lambda i: (0, 0))

    out = pl.pallas_call(
        mlp_kernel,
        out_shape=jax.ShapeDtypeStruct((b_pad, OUT_DIM), jnp.float32),
        grid=grid,
        in_specs=[
            pl.BlockSpec((tb, IN_DIM), lambda i: (i, 0)),     # x: tiled on batch
            const_spec((IN_DIM, H1)), const_spec((1, H1)),    # w1, b1
            const_spec((H1, H2)),     const_spec((1, H2)),    # w2, b2
            const_spec((H2, H3)),     const_spec((1, H3)),    # w3, b3
            const_spec((H3, OUT_DIM)), const_spec((1, OUT_DIM)),  # w4, b4
        ],
        out_specs=pl.BlockSpec((tb, OUT_DIM), lambda i: (i, 0)),
        compiler_params=pltpu.CompilerParams(
            dimension_semantics=("parallel",)),
    )(x, w1, b1, w2, b2, w3, b3, w4, b4)

    # Strip batch padding (zero rows never escape).
    return out[:b] if b_pad != b else out


def init_params(key):
    """Deterministic init mimicking PyTorch nn.Linear default
    (U[-1/sqrt(fan_in), 1/sqrt(fan_in)]). Weights stored as (in, out)."""
    dims = [(IN_DIM, H1), (H1, H2), (H2, H3), (H3, OUT_DIM)]
    params = []
    for (fan_in, fan_out) in dims:
        key, kw, kb = jax.random.split(key, 3)
        bound = 1.0 / (fan_in ** 0.5)
        w = jax.random.uniform(kw, (fan_in, fan_out), jnp.float32, -bound, bound)
        bias = jax.random.uniform(kb, (fan_out,), jnp.float32, -bound, bound)
        params.append((w, bias))
    return params


if __name__ == "__main__":
    key = jax.random.PRNGKey(0)
    key, kx = jax.random.split(key)

    # Small batch of MNIST-like inputs, NCHW (C*H*W = 784).
    x = jax.random.normal(kx, (2, 1, 28, 28), jnp.float32)

    params = init_params(key)
    prepped = prepare_params(params)   # one-time param prep (bf16 weights)

    out = neural_net_forward(x, prepped)
    out = jax.block_until_ready(out)

    # Pure-JAX reference of the same math (bf16 matmul inputs, f32 accumulate,
    # matching the kernel's precision).
    h = x.reshape(2, IN_DIM)
    for i, (w, bias) in enumerate(params):
        h = jnp.dot(h.astype(jnp.bfloat16), w.astype(jnp.bfloat16),
                    preferred_element_type=jnp.float32) + bias
        if i < 3:
            h = jnp.maximum(h, 0.0)

    assert out.shape == (2, 10)
    assert jnp.allclose(out, h, atol=1e-2, rtol=1e-2)

    print("KERNEL_OK")
</pallas_src>

<mosaic_0001>
module attributes {stable_mosaic.version = 11 : i64} {
  func.func @mlp_kernel(%arg0: i32, %arg1: memref<16x784xbf16, #tpu.memory_space<vmem>>, %arg2: memref<784x128xbf16, #tpu.memory_space<vmem>>, %arg3: memref<1x128xf32, #tpu.memory_space<vmem>>, %arg4: memref<128x64xbf16, #tpu.memory_space<vmem>>, %arg5: memref<1x64xf32, #tpu.memory_space<vmem>>, %arg6: memref<64x32xbf16, #tpu.memory_space<vmem>>, %arg7: memref<1x32xf32, #tpu.memory_space<vmem>>, %arg8: memref<32x10xbf16, #tpu.memory_space<vmem>>, %arg9: memref<1x10xf32, #tpu.memory_space<vmem>>, %arg10: memref<16x10xf32, #tpu.memory_space<vmem>>) attributes {dimension_semantics = [#tpu.dimension_semantics<parallel>], iteration_bounds = array<i64: 1>, scalar_prefetch = 0 : i64, scratch_operands = 0 : i64, tpu.core_type = #tpu.core_type<tc>, window_params = [{transform_indices = @transform_0, window_bounds = array<i64: 16, 784>}, {pipeline_mode = #tpu.pipeline_mode<synchronous>, transform_indices = @transform_1, window_bounds = array<i64: 784, 128>}, {pipeline_mode = #tpu.pipeline_mode<synchronous>, transform_indices = @transform_2, window_bounds = array<i64: 1, 128>}, {pipeline_mode = #tpu.pipeline_mode<synchronous>, transform_indices = @transform_3, window_bounds = array<i64: 128, 64>}, {pipeline_mode = #tpu.pipeline_mode<synchronous>, transform_indices = @transform_4, window_bounds = array<i64: 1, 64>}, {pipeline_mode = #tpu.pipeline_mode<synchronous>, transform_indices = @transform_5, window_bounds = array<i64: 64, 32>}, {pipeline_mode = #tpu.pipeline_mode<synchronous>, transform_indices = @transform_6, window_bounds = array<i64: 1, 32>}, {pipeline_mode = #tpu.pipeline_mode<synchronous>, transform_indices = @transform_7, window_bounds = array<i64: 32, 10>}, {pipeline_mode = #tpu.pipeline_mode<synchronous>, transform_indices = @transform_8, window_bounds = array<i64: 1, 10>}, {transform_indices = @transform_9, window_bounds = array<i64: 16, 10>}]} {
    %c0 = arith.constant 0 : index
    %c0_0 = arith.constant 0 : index
    %0 = vector.load %arg1[%c0, %c0_0] : memref<16x784xbf16, #tpu.memory_space<vmem>>, vector<16x784xbf16>
    %c0_1 = arith.constant 0 : index
    %c0_2 = arith.constant 0 : index
    %1 = vector.load %arg2[%c0_1, %c0_2] : memref<784x128xbf16, #tpu.memory_space<vmem>>, vector<784x128xbf16>
    %cst = arith.constant dense<0.000000e+00> : vector<16x128xf32>
    %2 = tpu.matmul %0, %1, %cst {dimension_numbers = #tpu.dot_dimension_numbers<[1], [0], [0], [1], [0, 0, 1, 1], [], []>} : vector<16x784xbf16>, vector<784x128xbf16>, vector<16x128xf32> -> vector<16x128xf32>
    %c0_3 = arith.constant 0 : index
    %c0_4 = arith.constant 0 : index
    %3 = vector.load %arg3[%c0_3, %c0_4] : memref<1x128xf32, #tpu.memory_space<vmem>>, vector<1x128xf32>
    %4 = vector.broadcast %3 : vector<1x128xf32> to vector<16x128xf32>
    %5 = arith.addf %2, %4 : vector<16x128xf32>
    %cst_5 = arith.constant 0.000000e+00 : f32
    %6 = vector.broadcast %cst_5 : f32 to vector<16x128xf32>
    %7 = arith.maximumf %5, %6 : vector<16x128xf32>
    %8 = arith.truncf %7 : vector<16x128xf32> to vector<16x128xbf16>
    %c0_6 = arith.constant 0 : index
    %c0_7 = arith.constant 0 : index
    %9 = vector.load %arg4[%c0_6, %c0_7] : memref<128x64xbf16, #tpu.memory_space<vmem>>, vector<128x64xbf16>
    %cst_8 = arith.constant dense<0.000000e+00> : vector<16x64xf32>
    %10 = tpu.matmul %8, %9, %cst_8 {dimension_numbers = #tpu.dot_dimension_numbers<[1], [0], [0], [1], [0, 0, 1, 1], [], []>} : vector<16x128xbf16>, vector<128x64xbf16>, vector<16x64xf32> -> vector<16x64xf32>
    %c0_9 = arith.constant 0 : index
    %c0_10 = arith.constant 0 : index
    %11 = vector.load %arg5[%c0_9, %c0_10] : memref<1x64xf32, #tpu.memory_space<vmem>>, vector<1x64xf32>
    %12 = vector.broadcast %11 : vector<1x64xf32> to vector<16x64xf32>
    %13 = arith.addf %10, %12 : vector<16x64xf32>
    %cst_11 = arith.constant 0.000000e+00 : f32
    %14 = vector.broadcast %cst_11 : f32 to vector<16x64xf32>
    %15 = arith.maximumf %13, %14 : vector<16x64xf32>
    %16 = arith.truncf %15 : vector<16x64xf32> to vector<16x64xbf16>
    %c0_12 = arith.constant 0 : index
    %c0_13 = arith.constant 0 : index
    %17 = vector.load %arg6[%c0_12, %c0_13] : memref<64x32xbf16, #tpu.memory_space<vmem>>, vector<64x32xbf16>
    %cst_14 = arith.constant dense<0.000000e+00> : vector<16x32xf32>
    %18 = tpu.matmul %16, %17, %cst_14 {dimension_numbers = #tpu.dot_dimension_numbers<[1], [0], [0], [1], [0, 0, 1, 1], [], []>} : vector<16x64xbf16>, vector<64x32xbf16>, vector<16x32xf32> -> vector<16x32xf32>
    %c0_15 = arith.constant 0 : index
    %c0_16 = arith.constant 0 : index
    %19 = vector.load %arg7[%c0_15, %c0_16] : memref<1x32xf32, #tpu.memory_space<vmem>>, vector<1x32xf32>
    %20 = vector.broadcast %19 : vector<1x32xf32> to vector<16x32xf32>
    %21 = arith.addf %18, %20 : vector<16x32xf32>
    %cst_17 = arith.constant 0.000000e+00 : f32
    %22 = vector.broadcast %cst_17 : f32 to vector<16x32xf32>
    %23 = arith.maximumf %21, %22 : vector<16x32xf32>
    %24 = arith.truncf %23 : vector<16x32xf32> to vector<16x32xbf16>
    %c0_18 = arith.constant 0 : index
    %c0_19 = arith.constant 0 : index
    %25 = vector.load %arg8[%c0_18, %c0_19] : memref<32x10xbf16, #tpu.memory_space<vmem>>, vector<32x10xbf16>
    %cst_20 = arith.constant dense<0.000000e+00> : vector<16x10xf32>
    %26 = tpu.matmul %24, %25, %cst_20 {dimension_numbers = #tpu.dot_dimension_numbers<[1], [0], [0], [1], [0, 0, 1, 1], [], []>} : vector<16x32xbf16>, vector<32x10xbf16>, vector<16x10xf32> -> vector<16x10xf32>
    %c0_21 = arith.constant 0 : index
    %c0_22 = arith.constant 0 : index
    %27 = vector.load %arg9[%c0_21, %c0_22] : memref<1x10xf32, #tpu.memory_space<vmem>>, vector<1x10xf32>
    %28 = vector.broadcast %27 : vector<1x10xf32> to vector<16x10xf32>
    %29 = arith.addf %26, %28 : vector<16x10xf32>
    %c0_23 = arith.constant 0 : index
    %c0_24 = arith.constant 0 : index
    %30 = vector.load %arg10[%c0_23, %c0_24] : memref<16x10xf32, #tpu.memory_space<vmem>>, vector<16x10xf32>
    tpu.vector_store %arg10[%c0_23, %c0_24], %29 {strides = array<i32>} : memref<16x10xf32, #tpu.memory_space<vmem>>, vector<16x10xf32>,
    return
  }
  func.func @transform_0(%arg0: i32) -> (i32, i32) {
    %c0_i32 = arith.constant 0 : i32
    %c0_i32_0 = arith.constant 0 : i32
    return %arg0, %c0_i32 : i32, i32
  }
  func.func @transform_1(%arg0: i32) -> (i32, i32) {
    %c0_i32 = arith.constant 0 : i32
    %c0_i32_0 = arith.constant 0 : i32
    %c0_i32_1 = arith.constant 0 : i32
    return %c0_i32, %c0_i32_0 : i32, i32
  }
  func.func @transform_2(%arg0: i32) -> (i32, i32) {
    %c0_i32 = arith.constant 0 : i32
    %c0_i32_0 = arith.constant 0 : i32
    %c0_i32_1 = arith.constant 0 : i32
    return %c0_i32, %c0_i32_0 : i32, i32
  }
  func.func @transform_3(%arg0: i32) -> (i32, i32) {
    %c0_i32 = arith.constant 0 : i32
    %c0_i32_0 = arith.constant 0 : i32
    %c0_i32_1 = arith.constant 0 : i32
    return %c0_i32, %c0_i32_0 : i32, i32
  }
  func.func @transform_4(%arg0: i32) -> (i32, i32) {
    %c0_i32 = arith.constant 0 : i32
    %c0_i32_0 = arith.constant 0 : i32
    %c0_i32_1 = arith.constant 0 : i32
    return %c0_i32, %c0_i32_0 : i32, i32
  }
  func.func @transform_5(%arg0: i32) -> (i32, i32) {
    %c0_i32 = arith.constant 0 : i32
    %c0_i32_0 = arith.constant 0 : i32
    %c0_i32_1 = arith.constant 0 : i32
    return %c0_i32, %c0_i32_0 : i32, i32
  }
  func.func @transform_6(%arg0: i32) -> (i32, i32) {
    %c0_i32 = arith.constant 0 : i32
    %c0_i32_0 = arith.constant 0 : i32
    %c0_i32_1 = arith.constant 0 : i32
    return %c0_i32, %c0_i32_0 : i32, i32
  }
  func.func @transform_7(%arg0: i32) -> (i32, i32) {
    %c0_i32 = arith.constant 0 : i32
    %c0_i32_0 = arith.constant 0 : i32
    %c0_i32_1 = arith.constant 0 : i32
    return %c0_i32, %c0_i32_0 : i32, i32
  }
  func.func @transform_8(%arg0: i32) -> (i32, i32) {
    %c0_i32 = arith.constant 0 : i32
    %c0_i32_0 = arith.constant 0 : i32
    %c0_i32_1 = arith.constant 0 : i32
    return %c0_i32, %c0_i32_0 : i32, i32
  }
  func.func @transform_9(%arg0: i32) -> (i32, i32) {
    %c0_i32 = arith.constant 0 : i32
    %c0_i32_0 = arith.constant 0 : i32
    return %arg0, %c0_i32 : i32, i32
  }
}

</mosaic_0001>

<llo_original>
// kernel: tpu_custom_call.1
$region0: #{tpu_custom_call.1}
  #allocation0 [shape = 'u32[]', space=smem, size = 0x4, offset = 0x4, fixed_abs, tag = 'smem constant byte address 0x4 - core index']
  #allocation1 [shape = 'u32[144,128]{1,0:T(1,128)}', space=vmem, size = 0x12000, scoped, tag = 'internal scratch']
  %s0 = inlined_call_operand.vmem [shape: bf16[16,784], index: 0, kind: input, shape index: {}]
  %s1 = inlined_call_operand.hbm [shape: bf16[784,128], index: 1, kind: input, shape index: {}]
  %s2 = inlined_call_operand.vmem [shape: f32[1,128], index: 2, kind: input, shape index: {}]
  %s3 = inlined_call_operand.vmem [shape: bf16[128,64], index: 3, kind: input, shape index: {}]
  %s4 = inlined_call_operand.vmem [shape: f32[1,64], index: 4, kind: input, shape index: {}]
  %s5 = inlined_call_operand.vmem [shape: bf16[64,32], index: 5, kind: input, shape index: {}]
  %s6 = inlined_call_operand.vmem [shape: f32[1,32], index: 6, kind: input, shape index: {}]
  %s7 = inlined_call_operand.vmem [shape: bf16[32,10], index: 7, kind: input, shape index: {}]
  %s8 = inlined_call_operand.vmem [shape: f32[1,10], index: 8, kind: input, shape index: {}]
  %s9 = inlined_call_operand.hbm [shape: f32[16,10], index: 9, kind: output, shape index: {}]
  %s10 = sld [smem:[#allocation0]]
  $region50: #{tpu_custom_call.1} parent=0
    _
  %s12 = ssub.s32 1, %s10
  %s13 = scalar_select 0, %s12, %s10
  $region1: #{tpu_custom_call.1} parent=0
    #allocation2 [shape = 'u8[200704]{0}', space=vmem, size = 0x31000, scoped, tag = 'input window, operand 1, single buffered']
    #allocation3 [shape = 's32[1]{0}', space=sflag, size = 0x4, scoped, tag = 'scoped memory for tpu_custom_call.1']
    #allocation4 [shape = 's32[1]{0}', space=sflag, size = 0x4, scoped, tag = 'scoped memory for tpu_custom_call.1']
    #allocation5 [shape = 'u8[8192]{0}', space=vmem, size = 0x2000, scoped, tag = 'output window, operand 0, single buffered']
    %14 = vsyncpa [#allocation3], 0
    %15 = vsyncpa [#allocation4], 0
    // Predicated region
    $region2: #{tpu_custom_call.1} parent=1 // pred_check
      _
    $region3: #{tpu_custom_call.1} parent=1 // pred_check_branch
      %17 = sbr.rel (0) target = $region5
    $region4: #{tpu_custom_call.1} parent=1 // pred_region
      _
    $region5: #{tpu_custom_call.1} parent=1 // pred_fallthru
      _
    // Predicated region
    $region6: #{tpu_custom_call.1} parent=1 // pred_check
      _
    $region7: #{tpu_custom_call.1} parent=1 // pred_check_branch
      %19 = sbr.rel (0) target = $region9
    $region8: #{tpu_custom_call.1} parent=1 // pred_region
      %s21 = ssub.s32 6272, 6272
      %22 = vsyncadd [#allocation3], %s21
      %s23 = sshll.u32 [#allocation2], 4
      %s24 = int_to_ptr.vmem [resolvable:$true] %s23
      %29 = dma.hbm_to_vmem [thread:$0]  %s1, 6272, %s24, [#allocation3], 64, 64, 4
    $region9: #{tpu_custom_call.1} parent=1 // pred_fallthru
      _
    // Predicated region
    $region10: #{tpu_custom_call.1} parent=1 // pred_check
      _
    $region11: #{tpu_custom_call.1} parent=1 // pred_check_branch
      %31 = sbr.rel (0) target = $region13
    $region12: #{tpu_custom_call.1} parent=1 // pred_region
      _
    $region13: #{tpu_custom_call.1} parent=1 // pred_fallthru
      _
    // Predicated region
    $region14: #{tpu_custom_call.1} parent=1 // pred_check
      _
    $region15: #{tpu_custom_call.1} parent=1 // pred_check_branch
      %33 = sbr.rel (0) target = $region17
    $region16: #{tpu_custom_call.1} parent=1 // pred_region
      _
    $region17: #{tpu_custom_call.1} parent=1 // pred_fallthru
      _
    // Predicated region
    $region18: #{tpu_custom_call.1} parent=1 // pred_check
      _
    $region19: #{tpu_custom_call.1} parent=1 // pred_check_branch
      %35 = sbr.rel (0) target = $region21
    $region20: #{tpu_custom_call.1} parent=1 // pred_region
      _
    $region21: #{tpu_custom_call.1} parent=1 // pred_fallthru
      _
    // Predicated region
    $region22: #{tpu_custom_call.1} parent=1 // pred_check
      _
    $region23: #{tpu_custom_call.1} parent=1 // pred_check_branch
      %37 = sbr.rel (0) target = $region25
    $region24: #{tpu_custom_call.1} parent=1 // pred_region
      _
    $region25: #{tpu_custom_call.1} parent=1 // pred_fallthru
      _
    // Predicated region
    $region26: #{tpu_custom_call.1} parent=1 // pred_check
      _
    $region27: #{tpu_custom_call.1} parent=1 // pred_check_branch
      %39 = sbr.rel (0) target = $region29
    $region28: #{tpu_custom_call.1} parent=1 // pred_region
      _
    $region29: #{tpu_custom_call.1} parent=1 // pred_fallthru
      _
    // Predicated region
    $region30: #{tpu_custom_call.1} parent=1 // pred_check
      _
    $region31: #{tpu_custom_call.1} parent=1 // pred_check_branch
      %41 = sbr.rel (0) target = $region33
    $region32: #{tpu_custom_call.1} parent=1 // pred_region
      _
    $region33: #{tpu_custom_call.1} parent=1 // pred_fallthru
      _
    // Predicated region
    $region34: #{tpu_custom_call.1} parent=1 // pred_check
      _
    $region35: #{tpu_custom_call.1} parent=1 // pred_check_branch
      %43 = sbr.rel (0) target = $region37
    $region36: #{tpu_custom_call.1} parent=1 // pred_region
      _
    $region37: #{tpu_custom_call.1} parent=1 // pred_fallthru
      _
    // Predicated region
    $region38: #{tpu_custom_call.1} parent=1 // pred_check
      _
    $region39: #{tpu_custom_call.1} parent=1 // pred_check_branch
      %45 = sbr.rel (0) target = $region41
    $region40: #{tpu_custom_call.1} parent=1 // pred_region
      %46 = dma.done [#allocation3], 6272
    $region41: #{tpu_custom_call.1} parent=1 // pred_fallthru
      _
    %v48 = vld [vmem:[%s0] sm:$0xff]
    %v49 = vld [vmem:[%s0 + $0x8] sm:$0xff]
    %v50 = vld [vmem:[%s0 + $0x10] sm:$0xff]
    %v51 = vld [vmem:[%s0 + $0x18] sm:$0xf]
    %v52 = vld [vmem:[%s0 + $0x1c] sm:$0xff]
    %v53 = vld [vmem:[%s0 + $0x24] sm:$0xff]
    %v54 = vld [vmem:[%s0 + $0x2c] sm:$0xff]
    %v55 = vld [vmem:[%s0 + $0x34] sm:$0xf]
    %v56 = vld [vmem:[#allocation2] sm:$0xf]
    %v57 = vld [vmem:[#allocation2 + $0x4] sm:$0xf]
    %v58 = vld [vmem:[#allocation2 + $0x8] sm:$0xf]
    %v59 = vld [vmem:[#allocation2 + $0xc] sm:$0xf]
    %v60 = vld [vmem:[#allocation2 + $0x10] sm:$0xf]
    %v61 = vld [vmem:[#allocation2 + $0x14] sm:$0xf]
    %v62 = vld [vmem:[#allocation2 + $0x18] sm:$0xf]
    %v63 = vld [vmem:[#allocation2 + $0x1c] sm:$0xf]
    %v64 = vld [vmem:[#allocation2 + $0x20] sm:$0xf]
    %v65 = vld [vmem:[#allocation2 + $0x24] sm:$0xf]
    %v66 = vld [vmem:[#allocation2 + $0x28] sm:$0xf]
    %v67 = vld [vmem:[#allocation2 + $0x2c] sm:$0xf]
    %v68 = vld [vmem:[#allocation2 + $0x30] sm:$0xf]
    %v69 = vld [vmem:[#allocation2 + $0x34] sm:$0xf]
    %v70 = vld [vmem:[#allocation2 + $0x38] sm:$0xf]
    %v71 = vld [vmem:[#allocation2 + $0x3c] sm:$0xf]
    %v72 = vld [vmem:[#allocation2 + $0x40] sm:$0xf]
    %v73 = vld [vmem:[#allocation2 + $0x44] sm:$0xf]
    %v74 = vld [vmem:[#allocation2 + $0x48] sm:$0xf]
    %v75 = vld [vmem:[#allocation2 + $0x4c] sm:$0xf]
    %v76 = vld [vmem:[#allocation2 + $0x50] sm:$0xf]
    %v77 = vld [vmem:[#allocation2 + $0x54] sm:$0xf]
    %v78 = vld [vmem:[#allocation2 + $0x58] sm:$0xf]
    %v79 = vld [vmem:[#allocation2 + $0x5c] sm:$0xf]
    %v80 = vld [vmem:[#allocation2 + $0x60] sm:$0xf]
    %v81 = vld [vmem:[#allocation2 + $0x64] sm:$0xf]
    %v82 = vld [vmem:[#allocation2 + $0x68] sm:$0xf]
    %v83 = vld [vmem:[#allocation2 + $0x6c] sm:$0xf]
    %v84 = vld [vmem:[#allocation2 + $0x70] sm:$0xf]
    %v85 = vld [vmem:[#allocation2 + $0x74] sm:$0xf]
    %v86 = vld [vmem:[#allocation2 + $0x78] sm:$0xf]
    %v87 = vld [vmem:[#allocation2 + $0x7c] sm:$0xf]
    %v88 = vld [vmem:[#allocation2 + $0x80] sm:$0xf]
    %v89 = vld [vmem:[#allocation2 + $0x84] sm:$0xf]
    %v90 = vld [vmem:[#allocation2 + $0x88] sm:$0xf]
    %v91 = vld [vmem:[#allocation2 + $0x8c] sm:$0xf]
    %v92 = vld [vmem:[#allocation2 + $0x90] sm:$0xf]
    %v93 = vld [vmem:[#allocation2 + $0x94] sm:$0xf]
    %v94 = vld [vmem:[#allocation2 + $0x98] sm:$0xf]
    %v95 = vld [vmem:[#allocation2 + $0x9c] sm:$0xf]
    %v96 = vld [vmem:[#allocation2 + $0xa0] sm:$0xf]
    %v97 = vld [vmem:[#allocation2 + $0xa4] sm:$0xf]
    %v98 = vld [vmem:[#allocation2 + $0xa8] sm:$0xf]
    %v99 = vld [vmem:[#allocation2 + $0xac] sm:$0xf]
    %v100 = vld [vmem:[#allocation2 + $0xb0] sm:$0xf]
    %v101 = vld [vmem:[#allocation2 + $0xb4] sm:$0xf]
    %v102 = vld [vmem:[#allocation2 + $0xb8] sm:$0xf]
    %v103 = vld [vmem:[#allocation2 + $0xbc] sm:$0xf]
    %v104 = vld [vmem:[#allocation2 + $0xc0] sm:$0xf]
    %v105 = vld [vmem:[#allocation2 + $0xc4] sm:$0xf]
    %v106 = vld [vmem:[#allocation2 + $0xc8] sm:$0xf]
    %v107 = vld [vmem:[#allocation2 + $0xcc] sm:$0xf]
    %v108 = vld [vmem:[#allocation2 + $0xd0] sm:$0xf]
    %v109 = vld [vmem:[#allocation2 + $0xd4] sm:$0xf]
    %v110 = vld [vmem:[#allocation2 + $0xd8] sm:$0xf]
    %v111 = vld [vmem:[#allocation2 + $0xdc] sm:$0xf]
    %v112 = vld [vmem:[#allocation2 + $0xe0] sm:$0xf]
    %v113 = vld [vmem:[#allocation2 + $0xe4] sm:$0xf]
    %v114 = vld [vmem:[#allocation2 + $0xe8] sm:$0xf]
    %v115 = vld [vmem:[#allocation2 + $0xec] sm:$0xf]
    %v116 = vld [vmem:[#allocation2 + $0xf0] sm:$0xf]
    %v117 = vld [vmem:[#allocation2 + $0xf4] sm:$0xf]
    %v118 = vld [vmem:[#allocation2 + $0xf8] sm:$0xf]
    %v119 = vld [vmem:[#allocation2 + $0xfc] sm:$0xf]
    %v120 = vld [vmem:[#allocation2 + $0x100] sm:$0xf]
    %v121 = vld [vmem:[#allocation2 + $0x104] sm:$0xf]
    %v122 = vld [vmem:[#allocation2 + $0x108] sm:$0xf]
    %v123 = vld [vmem:[#allocation2 + $0x10c] sm:$0xf]
    %v124 = vld [vmem:[#allocation2 + $0x110] sm:$0xf]
    %v125 = vld [vmem:[#allocation2 + $0x114] sm:$0xf]
    %v126 = vld [vmem:[#allocation2 + $0x118] sm:$0xf]
    %v127 = vld [vmem:[#allocation2 + $0x11c] sm:$0xf]
    %v128 = vld [vmem:[#allocation2 + $0x120] sm:$0xf]
    %v129 = vld [vmem:[#allocation2 + $0x124] sm:$0xf]
    %v130 = vld [vmem:[#allocation2 + $0x128] sm:$0xf]
    %v131 = vld [vmem:[#allocation2 + $0x12c] sm:$0xf]
    %v132 = vld [vmem:[#allocation2 + $0x130] sm:$0xf]
    %v133 = vld [vmem:[#allocation2 + $0x134] sm:$0xf]
    %v134 = vld [vmem:[#allocation2 + $0x138] sm:$0xf]
    %v135 = vld [vmem:[#allocation2 + $0x13c] sm:$0xf]
    %v136 = vld [vmem:[#allocation2 + $0x140] sm:$0xf]
    %v137 = vld [vmem:[#allocation2 + $0x144] sm:$0xf]
    %v138 = vld [vmem:[#allocation2 + $0x148] sm:$0xf]
    %v139 = vld [vmem:[#allocation2 + $0x14c] sm:$0xf]
    %v140 = vld [vmem:[#allocation2 + $0x150] sm:$0xf]
    %v141 = vld [vmem:[#allocation2 + $0x154] sm:$0xf]
    %v142 = vld [vmem:[#allocation2 + $0x158] sm:$0xf]
    %v143 = vld [vmem:[#allocation2 + $0x15c] sm:$0xf]
    %v144 = vld [vmem:[#allocation2 + $0x160] sm:$0xf]
    %v145 = vld [vmem:[#allocation2 + $0x164] sm:$0xf]
    %v146 = vld [vmem:[#allocation2 + $0x168] sm:$0xf]
    %v147 = vld [vmem:[#allocation2 + $0x16c] sm:$0xf]
    %v148 = vld [vmem:[#allocation2 + $0x170] sm:$0xf]
    %v149 = vld [vmem:[#allocation2 + $0x174] sm:$0xf]
    %v150 = vld [vmem:[#allocation2 + $0x178] sm:$0xf]
    %v151 = vld [vmem:[#allocation2 + $0x17c] sm:$0xf]
    %v152 = vld [vmem:[#allocation2 + $0x180] sm:$0xf]
    %v153 = vld [vmem:[#allocation2 + $0x184] sm:$0xf]
    %v154 = vld [vmem:[%s2] sm:$0x1]
    %v156 = vlaneseq
    %v157 = vshrl.u32 %v156, 7
    %v158 = vsub.s32 0, %v157
    %v159 = vrot.slane %v154, %v158
    %v169 = vunpack.c.l.b16 %v48
    %v170 = vunpack.c.h.b16 %v48
    %v171 = vunpack.c.l.b16 %v49
    %v172 = vunpack.c.h.b16 %v49
    %v173 = vunpack.c.l.b16 %v50
    %v174 = vunpack.c.h.b16 %v50
    %v175 = vunpack.c.l.b16 %v51
    %v176 = vunpack.c.l.b16 %v52
    %v177 = vunpack.c.h.b16 %v52
    %v178 = vunpack.c.l.b16 %v53
    %v179 = vunpack.c.h.b16 %v53
    %v180 = vunpack.c.l.b16 %v54
    %v181 = vunpack.c.h.b16 %v54
    %v182 = vunpack.c.l.b16 %v55
    %v183 = vpack.c.b16 %v176, %v169
    %v184 = vpack.c.b16 %v177, %v170
    %v185 = vpack.c.b16 %v178, %v171
    %v186 = vpack.c.b16 %v179, %v172
    %v187 = vpack.c.b16 %v180, %v173
    %v188 = vpack.c.b16 %v181, %v174
    %v189 = vpack.c.b16 %v182, %v175
    %v294 = vunpack.c.l.b16 %v56
    %v295 = vunpack.c.l.b16 %v57
    %v296 = vunpack.c.l.b16 %v58
    %v297 = vunpack.c.l.b16 %v59
    %v298 = vunpack.c.l.b16 %v60
    %v299 = vunpack.c.l.b16 %v61
    %v300 = vunpack.c.l.b16 %v62
    %v301 = vunpack.c.l.b16 %v63
    %v302 = vunpack.c.l.b16 %v64
    %v303 = vunpack.c.l.b16 %v65
    %v304 = vunpack.c.l.b16 %v66
    %v305 = vunpack.c.l.b16 %v67
    %v306 = vunpack.c.l.b16 %v68
    %v307 = vunpack.c.l.b16 %v69
    %v308 = vunpack.c.l.b16 %v70
    %v309 = vunpack.c.l.b16 %v71
    %v310 = vunpack.c.l.b16 %v72
    %v311 = vunpack.c.l.b16 %v73
    %v312 = vunpack.c.l.b16 %v74
    %v313 = vunpack.c.l.b16 %v75
    %v314 = vunpack.c.l.b16 %v76
    %v315 = vunpack.c.l.b16 %v77
    %v316 = vunpack.c.l.b16 %v78
    %v317 = vunpack.c.l.b16 %v79
    %v318 = vunpack.c.l.b16 %v80
    %v319 = vunpack.c.l.b16 %v81
    %v320 = vunpack.c.l.b16 %v82
    %v321 = vunpack.c.l.b16 %v83
    %v322 = vunpack.c.l.b16 %v84
    %v323 = vunpack.c.l.b16 %v85
    %v324 = vunpack.c.l.b16 %v86
    %v325 = vunpack.c.l.b16 %v87
    %v326 = vunpack.c.l.b16 %v88
    %v327 = vunpack.c.l.b16 %v89
    %v328 = vunpack.c.l.b16 %v90
    %v329 = vunpack.c.l.b16 %v91
    %v330 = vunpack.c.l.b16 %v92
    %v331 = vunpack.c.l.b16 %v93
    %v332 = vunpack.c.l.b16 %v94
    %v333 = vunpack.c.l.b16 %v95
    %v334 = vunpack.c.l.b16 %v96
    %v335 = vunpack.c.l.b16 %v97
    %v336 = vunpack.c.l.b16 %v98
    %v337 = vunpack.c.l.b16 %v99
    %v338 = vunpack.c.l.b16 %v100
    %v339 = vunpack.c.l.b16 %v101
    %v340 = vunpack.c.l.b16 %v102
    %v341 = vunpack.c.l.b16 %v103
    %v342 = vunpack.c.l.b16 %v104
    %v343 = vunpack.c.l.b16 %v105
    %v344 = vunpack.c.l.b16 %v106
    %v345 = vunpack.c.l.b16 %v107
    %v346 = vunpack.c.l.b16 %v108
    %v347 = vunpack.c.l.b16 %v109
    %v348 = vunpack.c.l.b16 %v110
    %v349 = vunpack.c.l.b16 %v111
    %v350 = vunpack.c.l.b16 %v112
    %v351 = vunpack.c.l.b16 %v113
    %v352 = vunpack.c.l.b16 %v114
    %v353 = vunpack.c.l.b16 %v115
    %v354 = vunpack.c.l.b16 %v116
    %v355 = vunpack.c.l.b16 %v117
    %v356 = vunpack.c.l.b16 %v118
    %v357 = vunpack.c.l.b16 %v119
    %v358 = vunpack.c.l.b16 %v120
    %v359 = vunpack.c.l.b16 %v121
    %v360 = vunpack.c.l.b16 %v122
    %v361 = vunpack.c.l.b16 %v123
    %v362 = vunpack.c.l.b16 %v124
    %v363 = vunpack.c.l.b16 %v125
    %v364 = vunpack.c.l.b16 %v126
    %v365 = vunpack.c.l.b16 %v127
    %v366 = vunpack.c.l.b16 %v128
    %v367 = vunpack.c.l.b16 %v129
    %v368 = vunpack.c.l.b16 %v130
    %v369 = vunpack.c.l.b16 %v131
    %v370 = vunpack.c.l.b16 %v132
    %v371 = vunpack.c.l.b16 %v133
    %v372 = vunpack.c.l.b16 %v134
    %v373 = vunpack.c.l.b16 %v135
    %v374 = vunpack.c.l.b16 %v136
    %v375 = vunpack.c.l.b16 %v137
    %v376 = vunpack.c.l.b16 %v138
    %v377 = vunpack.c.l.b16 %v139
    %v378 = vunpack.c.l.b16 %v140
    %v379 = vunpack.c.l.b16 %v141
    %v380 = vunpack.c.l.b16 %v142
    %v381 = vunpack.c.l.b16 %v143
    %v382 = vunpack.c.l.b16 %v144
    %v383 = vunpack.c.l.b16 %v145
    %v384 = vunpack.c.l.b16 %v146
    %v385 = vunpack.c.l.b16 %v147
    %v386 = vunpack.c.l.b16 %v148
    %v387 = vunpack.c.l.b16 %v149
    %v388 = vunpack.c.l.b16 %v150
    %v389 = vunpack.c.l.b16 %v151
    %v390 = vunpack.c.l.b16 %v152
    %v391 = vunpack.c.l.b16 %v153
    %v392 = vpack.c.b16 %v295, %v294
    %v393 = vpack.c.b16 %v297, %v296
    %v394 = vpack.c.b16 %v299, %v298
    %v395 = vpack.c.b16 %v301, %v300
    %v396 = vpack.c.b16 %v303, %v302
    %v397 = vpack.c.b16 %v305, %v304
    %v398 = vpack.c.b16 %v307, %v306
    %v399 = vpack.c.b16 %v309, %v308
    %v400 = vpack.c.b16 %v311, %v310
    %v401 = vpack.c.b16 %v313, %v312
    %v402 = vpack.c.b16 %v315, %v314
    %v403 = vpack.c.b16 %v317, %v316
    %v404 = vpack.c.b16 %v319, %v318
    %v405 = vpack.c.b16 %v321, %v320
    %v406 = vpack.c.b16 %v323, %v322
    %v407 = vpack.c.b16 %v325, %v324
    %v408 = vpack.c.b16 %v327, %v326
    %v409 = vpack.c.b16 %v329, %v328
    %v410 = vpack.c.b16 %v331, %v330
    %v411 = vpack.c.b16 %v333, %v332
    %v412 = vpack.c.b16 %v335, %v334
    %v413 = vpack.c.b16 %v337, %v336
    %v414 = vpack.c.b16 %v339, %v338
    %v415 = vpack.c.b16 %v341, %v340
    %v416 = vpack.c.b16 %v343, %v342
    %v417 = vpack.c.b16 %v345, %v344
    %v418 = vpack.c.b16 %v347, %v346
    %v419 = vpack.c.b16 %v349, %v348
    %v420 = vpack.c.b16 %v351, %v350
    %v421 = vpack.c.b16 %v353, %v352
    %v422 = vpack.c.b16 %v355, %v354
    %v423 = vpack.c.b16 %v357, %v356
    %v424 = vpack.c.b16 %v359, %v358
    %v425 = vpack.c.b16 %v361, %v360
    %v426 = vpack.c.b16 %v363, %v362
    %v427 = vpack.c.b16 %v365, %v364
    %v428 = vpack.c.b16 %v367, %v366
    %v429 = vpack.c.b16 %v369, %v368
    %v430 = vpack.c.b16 %v371, %v370
    %v431 = vpack.c.b16 %v373, %v372
    %v432 = vpack.c.b16 %v375, %v374
    %v433 = vpack.c.b16 %v377, %v376
    %v434 = vpack.c.b16 %v379, %v378
    %v435 = vpack.c.b16 %v381, %v380
    %v436 = vpack.c.b16 %v383, %v382
    %v437 = vpack.c.b16 %v385, %v384
    %v438 = vpack.c.b16 %v387, %v386
    %v439 = vpack.c.b16 %v389, %v388
    %v440 = vpack.c.b16 %v391, %v390
    %vm490 = vcmask 130048
    %v492 = vsel %vm490, %v189, 0
    %494 = vmatprep.subr.bf16.mxu0 0
    %495 = vmatpush1.bf16.msra.mxu0 %v392
    %496 = vmatprep.subr.bf16.mxu0 0
    %497 = vmatpush1.bf16.msra.mxu0 %v393
    %498 = vmatprep.subr.bf16.mxu0 0
    %499 = vmatpush1.bf16.msra.mxu0 %v394
    %500 = vmatprep.subr.bf16.mxu0 0
    %501 = vmatpush1.bf16.msra.mxu0 %v395
    %502 = vmatprep.subr.bf16.mxu0 0
    %503 = vmatpush1.bf16.msra.mxu0 %v396
    %504 = vmatprep.subr.bf16.mxu0 0
    %505 = vmatpush1.bf16.msra.mxu0 %v397
    %506 = vmatprep.subr.bf16.mxu0 0
    %507 = vmatpush1.bf16.msra.mxu0 %v398
    %508 = vmatprep.subr.bf16.mxu0 0
    %509 = vmatpush1.bf16.msra.mxu0 %v399
    %510 = vmatprep.subr.bf16.mxu0 0
    %511 = vmatpush1.bf16.msra.mxu0 %v400
    %512 = vmatprep.subr.bf16.mxu0 0
    %513 = vmatpush1.bf16.msra.mxu0 %v401
    %514 = vmatprep.subr.bf16.mxu0 0
    %515 = vmatpush1.bf16.msra.mxu0 %v402
    %516 = vmatprep.subr.bf16.mxu0 0
    %517 = vmatpush1.bf16.msra.mxu0 %v403
    %518 = vmatprep.subr.bf16.mxu0 0
    %519 = vmatpush1.bf16.msra.mxu0 %v404
    %520 = vmatprep.subr.bf16.mxu0 0
    %521 = vmatpush1.bf16.msra.mxu0 %v405
    %522 = vmatprep.subr.bf16.mxu0 0
    %523 = vmatpush1.bf16.msra.mxu0 %v406
    %524 = vmatprep.subr.bf16.mxu0 0
    %525 = vmatpush1.bf16.msra.mxu0 %v407
    %526 = vmatprep.mubr.bf16.mxu0 %v184
    %527 = vmatmul.mubr.bf16.gmra.mrb[0].mxu0 %v183
    %v528 = vpop.f32.mrb[0].mxu0
    %v529 = vadd.f32 %v159, %v528
    %v530 = vpop.f32.mrb[0].mxu0
    %v531 = vpop.f32.mrb[0].mxu0
    %v532 = vadd.f32 %v159, %v531
    %v533 = vpop.f32.mrb[0].mxu0
    %534 = vdwg.mxu0
    %535 = vmatprep.subr.bf16.mxu0 0
    %536 = vmatpush1.bf16.msra.mxu0 %v408
    %537 = vmatprep.subr.bf16.mxu0 0
    %538 = vmatpush1.bf16.msra.mxu0 %v409
    %539 = vmatprep.subr.bf16.mxu0 0
    %540 = vmatpush1.bf16.msra.mxu0 %v410
    %541 = vmatprep.subr.bf16.mxu0 0
    %542 = vmatpush1.bf16.msra.mxu0 %v411
    %543 = vmatprep.subr.bf16.mxu0 0
    %544 = vmatpush1.bf16.msra.mxu0 %v412
    %545 = vmatprep.subr.bf16.mxu0 0
    %546 = vmatpush1.bf16.msra.mxu0 %v413
    %547 = vmatprep.subr.bf16.mxu0 0
    %548 = vmatpush1.bf16.msra.mxu0 %v414
    %549 = vmatprep.subr.bf16.mxu0 0
    %550 = vmatpush1.bf16.msra.mxu0 %v415
    %551 = vmatprep.subr.bf16.mxu0 0
    %552 = vmatpush1.bf16.msra.mxu0 %v416
    %553 = vmatprep.subr.bf16.mxu0 0
    %554 = vmatpush1.bf16.msra.mxu0 %v417
    %555 = vmatprep.subr.bf16.mxu0 0
    %556 = vmatpush1.bf16.msra.mxu0 %v418
    %557 = vmatprep.subr.bf16.mxu0 0
    %558 = vmatpush1.bf16.msra.mxu0 %v419
    %559 = vmatprep.subr.bf16.mxu0 0
    %560 = vmatpush1.bf16.msra.mxu0 %v420
    %561 = vmatprep.subr.bf16.mxu0 0
    %562 = vmatpush1.bf16.msra.mxu0 %v421
    %563 = vmatprep.subr.bf16.mxu0 0
    %564 = vmatpush1.bf16.msra.mxu0 %v422
    %565 = vmatprep.subr.bf16.mxu0 0
    %566 = vmatpush1.bf16.msra.mxu0 %v423
    %567 = vmatprep.mubr.bf16.mxu0 %v186
    %568 = vmatmul.mubr.bf16.gmra.mrb[0].mxu0 %v185
    %v569 = vpop.f32.mrb[0].mxu0
    %v570 = vadd.f32 %v529, %v569
    %v571 = vpop.f32.mrb[0].mxu0
    %v572 = vpop.f32.mrb[0].mxu0
    %v573 = vadd.f32 %v532, %v572
    %v574 = vpop.f32.mrb[0].mxu0
    %575 = vdwg.mxu0
    %576 = vmatprep.subr.bf16.mxu0 0
    %577 = vmatpush1.bf16.msra.mxu0 %v424
    %578 = vmatprep.subr.bf16.mxu0 0
    %579 = vmatpush1.bf16.msra.mxu0 %v425
    %580 = vmatprep.subr.bf16.mxu0 0
    %581 = vmatpush1.bf16.msra.mxu0 %v426
    %582 = vmatprep.subr.bf16.mxu0 0
    %583 = vmatpush1.bf16.msra.mxu0 %v427
    %584 = vmatprep.subr.bf16.mxu0 0
    %585 = vmatpush1.bf16.msra.mxu0 %v428
    %586 = vmatprep.subr.bf16.mxu0 0
    %587 = vmatpush1.bf16.msra.mxu0 %v429
    %588 = vmatprep.subr.bf16.mxu0 0
    %589 = vmatpush1.bf16.msra.mxu0 %v430
    %590 = vmatprep.subr.bf16.mxu0 0
    %591 = vmatpush1.bf16.msra.mxu0 %v431
    %592 = vmatprep.subr.bf16.mxu0 0
    %593 = vmatpush1.bf16.msra.mxu0 %v432
    %594 = vmatprep.subr.bf16.mxu0 0
    %595 = vmatpush1.bf16.msra.mxu0 %v433
    %596 = vmatprep.subr.bf16.mxu0 0
    %597 = vmatpush1.bf16.msra.mxu0 %v434
    %598 = vmatprep.subr.bf16.mxu0 0
    %599 = vmatpush1.bf16.msra.mxu0 %v435
    %600 = vmatprep.subr.bf16.mxu0 0
    %601 = vmatpush1.bf16.msra.mxu0 %v436
    %602 = vmatprep.subr.bf16.mxu0 0
    %603 = vmatpush1.bf16.msra.mxu0 %v437
    %604 = vmatprep.subr.bf16.mxu0 0
    %605 = vmatpush1.bf16.msra.mxu0 %v438
    %606 = vmatprep.subr.bf16.mxu0 0
    %607 = vmatpush1.bf16.msra.mxu0 %v439
    %608 = vmatprep.mubr.bf16.mxu0 %v188
    %609 = vmatmul.mubr.bf16.gmra.mrb[0].mxu0 %v187
    %v610 = vpop.f32.mrb[0].mxu0
    %v611 = vadd.f32 %v570, %v610
    %v612 = vpop.f32.mrb[0].mxu0
    %v613 = vpop.f32.mrb[0].mxu0
    %v614 = vadd.f32 %v573, %v613
    %v615 = vpop.f32.mrb[0].mxu0
    %616 = vdwg.mxu0
    %617 = vmatprep.subr.bf16.mxu0 0
    %618 = vmatpush1.bf16.msra.mxu0 %v440
    %619 = vmatprep.subr.bf16.mxu0 0
    %620 = vmatpush1.bf16.msra.mxu0 0
    %621 = vmatprep.subr.bf16.mxu0 0
    %622 = vmatpush1.bf16.msra.mxu0 0
    %623 = vmatprep.subr.bf16.mxu0 0
    %624 = vmatpush1.bf16.msra.mxu0 0
    %625 = vmatprep.subr.bf16.mxu0 0
    %626 = vmatpush1.bf16.msra.mxu0 0
    %627 = vmatprep.subr.bf16.mxu0 0
    %628 = vmatpush1.bf16.msra.mxu0 0
    %629 = vmatprep.subr.bf16.mxu0 0
    %630 = vmatpush1.bf16.msra.mxu0 0
    %631 = vmatprep.subr.bf16.mxu0 0
    %632 = vmatpush1.bf16.msra.mxu0 0
    %633 = vmatprep.subr.bf16.mxu0 0
    %634 = vmatpush1.bf16.msra.mxu0 0
    %635 = vmatprep.subr.bf16.mxu0 0
    %636 = vmatpush1.bf16.msra.mxu0 0
    %637 = vmatprep.subr.bf16.mxu0 0
    %638 = vmatpush1.bf16.msra.mxu0 0
    %639 = vmatprep.subr.bf16.mxu0 0
    %640 = vmatpush1.bf16.msra.mxu0 0
    %641 = vmatprep.subr.bf16.mxu0 0
    %642 = vmatpush1.bf16.msra.mxu0 0
    %643 = vmatprep.subr.bf16.mxu0 0
    %644 = vmatpush1.bf16.msra.mxu0 0
    %645 = vmatprep.subr.bf16.mxu0 0
    %646 = vmatpush1.bf16.msra.mxu0 0
    %647 = vmatprep.subr.bf16.mxu0 0
    %648 = vmatpush1.bf16.msra.mxu0 0
    %649 = vmatprep.mubr.bf16.mxu0 0
    %650 = vmatmul.mubr.bf16.gmra.mrb[0].mxu0 %v492
    %v651 = vpop.f32.mrb[0].mxu0
    %v652 = vadd.f32 %v611, %v651
    %v653 = vpop.f32.mrb[0].mxu0
    %v654 = vpop.f32.mrb[0].mxu0
    %v655 = vadd.f32 %v614, %v654
    %v656 = vpop.f32.mrb[0].mxu0
    %657 = vdwg.mxu0
    %v658 = vmax.f32 %v652, 0.0
    %v659 = vmax.f32 %v655, 0.0
    %v660 = vpack.c.bf16 %v659, %v658
    %v661 = vld [vmem:[%s3] sm:$0xf]
    %v662 = vld [vmem:[%s3 + $0x4] sm:$0xf]
    %v663 = vld [vmem:[%s3 + $0x8] sm:$0xf]
    %v664 = vld [vmem:[%s3 + $0xc] sm:$0xf]
    %v665 = vld [vmem:[%s3 + $0x10] sm:$0xf]
    %v666 = vld [vmem:[%s3 + $0x14] sm:$0xf]
    %v667 = vld [vmem:[%s3 + $0x18] sm:$0xf]
    %v668 = vld [vmem:[%s3 + $0x1c] sm:$0xf]
    %v669 = vld [vmem:[%s3 + $0x20] sm:$0xf]
    %v670 = vld [vmem:[%s3 + $0x24] sm:$0xf]
    %v671 = vld [vmem:[%s3 + $0x28] sm:$0xf]
    %v672 = vld [vmem:[%s3 + $0x2c] sm:$0xf]
    %v673 = vld [vmem:[%s3 + $0x30] sm:$0xf]
    %v674 = vld [vmem:[%s3 + $0x34] sm:$0xf]
    %v675 = vld [vmem:[%s3 + $0x38] sm:$0xf]
    %v676 = vld [vmem:[%s3 + $0x3c] sm:$0xf]
    %v677 = vld [vmem:[%s4] sm:$0x1]
    %v679 = vlaneseq
    %v680 = vshrl.u32 %v679, 7
    %v681 = vsub.s32 0, %v680
    %v682 = vrot.slane %v677, %v681
    %v700 = vunpack.c.l.b16 %v661
    %v701 = vunpack.c.l.b16 %v662
    %v702 = vunpack.c.l.b16 %v663
    %v703 = vunpack.c.l.b16 %v664
    %v704 = vunpack.c.l.b16 %v665
    %v705 = vunpack.c.l.b16 %v666
    %v706 = vunpack.c.l.b16 %v667
    %v707 = vunpack.c.l.b16 %v668
    %v708 = vunpack.c.l.b16 %v669
    %v709 = vunpack.c.l.b16 %v670
    %v710 = vunpack.c.l.b16 %v671
    %v711 = vunpack.c.l.b16 %v672
    %v712 = vunpack.c.l.b16 %v673
    %v713 = vunpack.c.l.b16 %v674
    %v714 = vunpack.c.l.b16 %v675
    %v715 = vunpack.c.l.b16 %v676
    %v716 = vpack.c.b16 %v701, %v700
    %v717 = vpack.c.b16 %v703, %v702
    %v718 = vpack.c.b16 %v705, %v704
    %v719 = vpack.c.b16 %v707, %v706
    %v720 = vpack.c.b16 %v709, %v708
    %v721 = vpack.c.b16 %v711, %v710
    %v722 = vpack.c.b16 %v713, %v712
    %v723 = vpack.c.b16 %v715, %v714
    %732 = vmatprep.subr.bf16.mxu0 0
    %733 = vmatpush1.bf16.msra.mxu0 %v716
    %734 = vmatprep.subr.bf16.mxu0 0
    %735 = vmatpush1.bf16.msra.mxu0 %v717
    %736 = vmatprep.subr.bf16.mxu0 0
    %737 = vmatpush1.bf16.msra.mxu0 %v718
    %738 = vmatprep.subr.bf16.mxu0 0
    %739 = vmatpush1.bf16.msra.mxu0 %v719
    %740 = vmatprep.subr.bf16.mxu0 0
    %741 = vmatpush1.bf16.msra.mxu0 %v720
    %742 = vmatprep.subr.bf16.mxu0 0
    %743 = vmatpush1.bf16.msra.mxu0 %v721
    %744 = vmatprep.subr.bf16.mxu0 0
    %745 = vmatpush1.bf16.msra.mxu0 %v722
    %746 = vmatprep.subr.bf16.mxu0 0
    %747 = vmatpush1.bf16.msra.mxu0 %v723
    %748 = vmatprep.subr.bf16.mxu0 0
    %749 = vmatpush1.bf16.msra.mxu0 0
    %750 = vmatprep.subr.bf16.mxu0 0
    %751 = vmatpush1.bf16.msra.mxu0 0
    %752 = vmatprep.subr.bf16.mxu0 0
    %753 = vmatpush1.bf16.msra.mxu0 0
    %754 = vmatprep.subr.bf16.mxu0 0
    %755 = vmatpush1.bf16.msra.mxu0 0
    %756 = vmatprep.subr.bf16.mxu0 0
    %757 = vmatpush1.bf16.msra.mxu0 0
    %758 = vmatprep.subr.bf16.mxu0 0
    %759 = vmatpush1.bf16.msra.mxu0 0
    %760 = vmatprep.subr.bf16.mxu0 0
    %761 = vmatpush1.bf16.msra.mxu0 0
    %762 = vmatprep.subr.bf16.mxu0 0
    %763 = vmatpush1.bf16.msra.mxu0 0
    %764 = vmatprep.mubr.bf16.mxu0 0
    %765 = vmatmul.mubr.bf16.gmra.mrb[0].mxu0 %v660
    %v766 = vpop.f32.mrb[0].mxu0
    %v767 = vadd.f32 %v682, %v766
    %v768 = vpop.f32.mrb[0].mxu0
    %v769 = vpop.f32.mrb[0].mxu0
    %v770 = vadd.f32 %v682, %v769
    %v771 = vpop.f32.mrb[0].mxu0
    %772 = vdwg.mxu0
    %v773 = vmax.f32 %v767, 0.0
    %v774 = vmax.f32 %v770, 0.0
    %v775 = vpack.c.bf16 %v774, %v773
    %v776 = vld [vmem:[%s5] sm:$0xf]
    %v777 = vld [vmem:[%s5 + $0x4] sm:$0xf]
    %v778 = vld [vmem:[%s5 + $0x8] sm:$0xf]
    %v779 = vld [vmem:[%s5 + $0xc] sm:$0xf]
    %v780 = vld [vmem:[%s5 + $0x10] sm:$0xf]
    %v781 = vld [vmem:[%s5 + $0x14] sm:$0xf]
    %v782 = vld [vmem:[%s5 + $0x18] sm:$0xf]
    %v783 = vld [vmem:[%s5 + $0x1c] sm:$0xf]
    %v784 = vld [vmem:[%s6] sm:$0x1]
    %v786 = vlaneseq
    %v787 = vshrl.u32 %v786, 7
    %v788 = vsub.s32 0, %v787
    %v789 = vrot.slane %v784, %v788
    %v799 = vunpack.c.l.b16 %v776
    %v800 = vunpack.c.l.b16 %v777
    %v801 = vunpack.c.l.b16 %v778
    %v802 = vunpack.c.l.b16 %v779
    %v803 = vunpack.c.l.b16 %v780
    %v804 = vunpack.c.l.b16 %v781
    %v805 = vunpack.c.l.b16 %v782
    %v806 = vunpack.c.l.b16 %v783
    %v807 = vpack.c.b16 %v800, %v799
    %v808 = vpack.c.b16 %v802, %v801
    %v809 = vpack.c.b16 %v804, %v803
    %v810 = vpack.c.b16 %v806, %v805
    %vm815 = vcmask 523264
    %v817 = vsel %vm815, %v775, 0
    %819 = vmatprep.subr.bf16.mxu0 0
    %820 = vmatpush1.bf16.msra.mxu0 %v807
    %821 = vmatprep.subr.bf16.mxu0 0
    %822 = vmatpush1.bf16.msra.mxu0 %v808
    %823 = vmatprep.subr.bf16.mxu0 0
    %824 = vmatpush1.bf16.msra.mxu0 %v809
    %825 = vmatprep.subr.bf16.mxu0 0
    %826 = vmatpush1.bf16.msra.mxu0 %v810
    %827 = vmatprep.subr.bf16.mxu0 0
    %828 = vmatpush1.bf16.msra.mxu0 0
    %829 = vmatprep.subr.bf16.mxu0 0
    %830 = vmatpush1.bf16.msra.mxu0 0
    %831 = vmatprep.subr.bf16.mxu0 0
    %832 = vmatpush1.bf16.msra.mxu0 0
    %833 = vmatprep.subr.bf16.mxu0 0
    %834 = vmatpush1.bf16.msra.mxu0 0
    %835 = vmatprep.subr.bf16.mxu0 0
    %836 = vmatpush1.bf16.msra.mxu0 0
    %837 = vmatprep.subr.bf16.mxu0 0
    %838 = vmatpush1.bf16.msra.mxu0 0
    %839 = vmatprep.subr.bf16.mxu0 0
    %840 = vmatpush1.bf16.msra.mxu0 0
    %841 = vmatprep.subr.bf16.mxu0 0
    %842 = vmatpush1.bf16.msra.mxu0 0
    %843 = vmatprep.subr.bf16.mxu0 0
    %844 = vmatpush1.bf16.msra.mxu0 0
    %845 = vmatprep.subr.bf16.mxu0 0
    %846 = vmatpush1.bf16.msra.mxu0 0
    %847 = vmatprep.subr.bf16.mxu0 0
    %848 = vmatpush1.bf16.msra.mxu0 0
    %849 = vmatprep.subr.bf16.mxu0 0
    %850 = vmatpush1.bf16.msra.mxu0 0
    %851 = vmatprep.mubr.bf16.mxu0 0
    %852 = vmatmul.mubr.bf16.gmra.mrb[0].mxu0 %v817
    %v853 = vpop.f32.mrb[0].mxu0
    %v854 = vadd.f32 %v789, %v853
    %v855 = vpop.f32.mrb[0].mxu0
    %v856 = vpop.f32.mrb[0].mxu0
    %v857 = vadd.f32 %v789, %v856
    %v858 = vpop.f32.mrb[0].mxu0
    %859 = vdwg.mxu0
    %v860 = vmax.f32 %v854, 0.0
    %v861 = vmax.f32 %v857, 0.0
    %v862 = vpack.c.bf16 %v861, %v860
    %v863 = vld [vmem:[%s7] sm:$0xf]
    %v864 = vld [vmem:[%s7 + $0x4] sm:$0xf]
    %v865 = vld [vmem:[%s7 + $0x8] sm:$0xf]
    %v866 = vld [vmem:[%s7 + $0xc] sm:$0xf]
    %v867 = vld [vmem:[%s8] sm:$0x1]
    %v869 = vlaneseq
    %v870 = vshrl.u32 %v869, 7
    %v871 = vsub.s32 0, %v870
    %v872 = vrot.slane %v867, %v871
    %v878 = vunpack.c.l.b16 %v863
    %v879 = vunpack.c.l.b16 %v864
    %v880 = vunpack.c.l.b16 %v865
    %v881 = vunpack.c.l.b16 %v866
    %v882 = vpack.c.b16 %v879, %v878
    %v883 = vpack.c.b16 %v881, %v880
    %vm886 = vcmask 261120
    %v888 = vsel %vm886, %v862, 0
    %890 = vmatprep.subr.bf16.mxu0 0
    %891 = vmatpush1.bf16.msra.mxu0 %v882
    %892 = vmatprep.subr.bf16.mxu0 0
    %893 = vmatpush1.bf16.msra.mxu0 %v883
    %894 = vmatprep.subr.bf16.mxu0 0
    %895 = vmatpush1.bf16.msra.mxu0 0
    %896 = vmatprep.subr.bf16.mxu0 0
    %897 = vmatpush1.bf16.msra.mxu0 0
    %898 = vmatprep.subr.bf16.mxu0 0
    %899 = vmatpush1.bf16.msra.mxu0 0
    %900 = vmatprep.subr.bf16.mxu0 0
    %901 = vmatpush1.bf16.msra.mxu0 0
    %902 = vmatprep.subr.bf16.mxu0 0
    %903 = vmatpush1.bf16.msra.mxu0 0
    %904 = vmatprep.subr.bf16.mxu0 0
    %905 = vmatpush1.bf16.msra.mxu0 0
    %906 = vmatprep.subr.bf16.mxu0 0
    %907 = vmatpush1.bf16.msra.mxu0 0
    %908 = vmatprep.subr.bf16.mxu0 0
    %909 = vmatpush1.bf16.msra.mxu0 0
    %910 = vmatprep.subr.bf16.mxu0 0
    %911 = vmatpush1.bf16.msra.mxu0 0
    %912 = vmatprep.subr.bf16.mxu0 0
    %913 = vmatpush1.bf16.msra.mxu0 0
    %914 = vmatprep.subr.bf16.mxu0 0
    %915 = vmatpush1.bf16.msra.mxu0 0
    %916 = vmatprep.subr.bf16.mxu0 0
    %917 = vmatpush1.bf16.msra.mxu0 0
    %918 = vmatprep.subr.bf16.mxu0 0
    %919 = vmatpush1.bf16.msra.mxu0 0
    %920 = vmatprep.subr.bf16.mxu0 0
    %921 = vmatpush1.bf16.msra.mxu0 0
    %922 = vmatprep.mubr.bf16.mxu0 0
    %923 = vmatmul.mubr.bf16.gmra.mrb[0].mxu0 %v888
    %v924 = vpop.f32.mrb[0].mxu0
    %v925 = vadd.f32 %v872, %v924
    %v926 = vpop.f32.mrb[0].mxu0
    %v927 = vpop.f32.mrb[0].mxu0
    %v928 = vadd.f32 %v872, %v927
    %v929 = vpop.f32.mrb[0].mxu0
    %930 = vdwg.mxu0
    %vm931 = vcmask 80896
    %932 = vst.msk [vmem:[#allocation5] sm:$0xff] %vm931, %v925
    %933 = vst.msk [vmem:[#allocation5 + $0x8] sm:$0xff] %vm931, %v928
    // Predicated region
    $region42: #{tpu_custom_call.1} parent=1 // pred_check
      _
    $region43: #{tpu_custom_call.1} parent=1 // pred_check_branch
      %935 = sbr.rel (0) target = $region45
    $region44: #{tpu_custom_call.1} parent=1 // pred_region
      %s937 = ssub.s32 256, 256
      %938 = vsyncadd [#allocation4], %s937
      %s939 = sshll.u32 [#allocation5], 4
      %s940 = int_to_ptr.vmem [resolvable:$true] %s939
      %945 = dma.vmem_to_hbm [thread:$0]  %s940, 256, %s9, [#allocation4], 128, 128, 8
    $region45: #{tpu_custom_call.1} parent=1 // pred_fallthru
      _
    // Predicated region
    $region46: #{tpu_custom_call.1} parent=1 // pred_check
      _
    $region47: #{tpu_custom_call.1} parent=1 // pred_check_branch
      %947 = sbr.rel (0) target = $region49
    $region48: #{tpu_custom_call.1} parent=1 // pred_region
      %948 = dma.done [#allocation4], 256
    $region49: #{tpu_custom_call.1} parent=1 // pred_fallthru
      _
    %949 = vsyncpa [#allocation3], 1
    %950 = vsyncpa [#allocation4], 1

</llo_original>
